<compile_context>
chip_gen: v7x
topology: tpu7x:2x2x1
jax: 0.10.0
libtpu: 0.0.40
codegen_flags: <defaults>
</compile_context>

<pallas_src>
import functools

import jax
import jax.numpy as jnp
from jax.experimental import pallas as pl
from jax.experimental.pallas import tpu as pltpu

HIDDEN = 512
LANE = 128
SUBLANE = 8

# If w1 (in compute dtype) is bigger than this, split the fc1 contraction over
# an inner grid axis instead of keeping the whole (in_feature, 512) block
# VMEM-resident (v7x: 64 MiB VMEM per TensorCore).
_W1_RESIDENT_LIMIT = 8 * 1024 * 1024
_BLOCK_K = 1024
# Per-step VMEM budget used when sizing the batch tile (headroom on v7x's
# 64 MiB physical VMEM; raised explicitly above v5e's 16 MiB scoped default).
_VMEM_BUDGET = 40 * 1024 * 1024


def _cdiv(a, b):
    return -(-a // b)


def _round_up(v, m):
    return _cdiv(v, m) * m


def _sgc_kernel(x_ref, w1_ref, b1_ref, w2_ref, b2_ref, o_ref, h_acc):
    """fc1 (optionally K-tiled, f32 accumulate) -> +b1 -> fc2 -> +b2."""
    k = pl.program_id(1)

    @pl.when(k == 0)
    def _():
        h_acc[...] = jnp.zeros_like(h_acc)

    # Cast the activation tile to the weight compute dtype on-VMEM (avoids a
    # separate XLA convert pass over HBM); accumulate fc1 in f32 on the MXU.
    h_acc[...] += jnp.dot(x_ref[...].astype(w1_ref.dtype), w1_ref[...],
                          preferred_element_type=jnp.float32)

    @pl.when(k == pl.num_programs(1) - 1)
    def _():
        h = h_acc[...] + b1_ref[...]          # (1, 512) broadcasts over rows
        # NOTE: with bf16 compute the fc1 result is down-cast to bf16 before
        # fc2 ("bf16 operands, f32 accumulation"); pass compute_dtype=float32
        # for the bit-tight-to-reference path.
        y = jnp.dot(h.astype(w2_ref.dtype), w2_ref[...],
                    preferred_element_type=jnp.float32)
        o_ref[...] = (y + b2_ref[...]).astype(o_ref.dtype)


@functools.partial(jax.jit, static_argnames=("block_m", "compute_dtype"))
def sgc_forward(x, w1, b1, w2, b2, *, block_m=1024, compute_dtype=jnp.bfloat16):
    """x: [N, in_f]; w1: [in_f, 512]; b1: [1, 512]; w2: [512, out_f]; b2: [1, out_f]."""
    n, in_feature = x.shape
    out_feature = w2.shape[1]
    out_dtype = x.dtype

    if compute_dtype is None:
        compute_dtype = w1.dtype
    w_itemsize = jnp.dtype(compute_dtype).itemsize
    x_itemsize = x.dtype.itemsize
    o_itemsize = jnp.dtype(out_dtype).itemsize

    # --- K (in_feature) tiling: only when w1 is too big to keep resident. ---
    if in_feature * HIDDEN * w_itemsize > _W1_RESIDENT_LIMIT:
        tk = _BLOCK_K
        f_in = _round_up(in_feature, tk)
    else:
        tk = in_feature            # full-array dim: no (8,128) constraint, no pad
        f_in = in_feature
    num_k = f_in // tk

    # --- Batch tiling: minimise dead padding, >=2 steps so the "parallel"
    # --- axis spans both v7x TensorCores, then cap by the VMEM budget. ---
    num_m = max(1, _cdiv(n, block_m))
    if n >= 2 * SUBLANE:
        num_m = max(num_m, 2)
    tm = _round_up(_cdiv(n, num_m), SUBLANE)

    w1_buffers = 1 if num_k == 1 else 2
    resident = (w1_buffers * tk * HIDDEN * w_itemsize       # w1
                + HIDDEN * b1.dtype.itemsize                # b1 (1 buffer)
                + HIDDEN * out_feature * w_itemsize         # w2 (1 buffer)
                + out_feature * b2.dtype.itemsize)          # b2 (1 buffer)
    per_row = (2 * tk * x_itemsize                 # x tile, double-buffered
               + 2 * out_feature * o_itemsize      # out tile, double-buffered
               + HIDDEN * 4)                       # f32 fc1 accumulator scratch
    tm_budget = max(SUBLANE,
                    ((_VMEM_BUDGET - resident) // per_row) // SUBLANE * SUBLANE)
    tm = max(SUBLANE, min(tm, tm_budget))

    n_pad = _round_up(n, tm)
    grid = (n_pad // tm, num_k)

    # Only pad where unavoidable (ragged batch remainder / K remainder when
    # K-tiled); no feature-dim padding of x or of the output.
    x_p = x
    w1_p = w1.astype(compute_dtype)
    w2_p = w2.astype(compute_dtype)
    if n_pad != n or f_in != in_feature:
        x_p = jnp.pad(x, ((0, n_pad - n), (0, f_in - in_feature)))
    if f_in != in_feature:
        w1_p = jnp.pad(w1_p, ((0, f_in - in_feature), (0, 0)))

    vmem_needed = resident + tm * per_row + (1 << 20)
    vmem_limit = int(min(64 * 1024 * 1024, max(32 * 1024 * 1024, vmem_needed)))

    flops = 2 * n * (in_feature * HIDDEN + HIDDEN * out_feature)
    bytes_accessed = (x_p.size * x_p.dtype.itemsize
                      + w1_p.size * w1_p.dtype.itemsize
                      + b1.size * b1.dtype.itemsize
                      + w2_p.size * w2_p.dtype.itemsize
                      + b2.size * b2.dtype.itemsize
                      + n * out_feature * o_itemsize)

    resident_kwargs = dict(pipeline_mode=pl.Buffered(1))   # never re-fetched
    w1_kwargs = resident_kwargs if num_k == 1 else {}      # K-tiled w1 streams

    out = pl.pallas_call(
        _sgc_kernel,
        out_shape=jax.ShapeDtypeStruct((n_pad, out_feature), out_dtype),
        grid=grid,
        in_specs=[
            # batch/K-tiled activation (streamed)
            pl.BlockSpec((tm, tk), lambda i, k: (i, k)),
            # weights/biases: constant index_maps -> VMEM-resident
            pl.BlockSpec((tk, HIDDEN), lambda i, k: (k, 0), **w1_kwargs),
            pl.BlockSpec((1, HIDDEN), lambda i, k: (0, 0), **resident_kwargs),
            pl.BlockSpec((HIDDEN, out_feature), lambda i, k: (0, 0),
                         **resident_kwargs),
            pl.BlockSpec((1, out_feature), lambda i, k: (0, 0),
                         **resident_kwargs),
        ],
        out_specs=pl.BlockSpec((tm, out_feature), lambda i, k: (i, 0)),
        scratch_shapes=[pltpu.VMEM((tm, HIDDEN), jnp.float32)],
        compiler_params=pltpu.CompilerParams(
            dimension_semantics=("parallel", "arbitrary"),
            vmem_limit_bytes=vmem_limit,
        ),
        cost_estimate=pl.CostEstimate(
            flops=flops, transcendentals=0, bytes_accessed=bytes_accessed),
    )(x_p, w1_p, b1, w2_p, b2)

    # Slice off only the batch padding (no feature padding to remove).
    return out[:n]


def init_sgc_params(key, in_feature, out_feature, hidden=HIDDEN,
                    dtype=jnp.float32):
    """Deterministic init mimicking nn.Linear default (uniform +/- 1/sqrt(fan_in))."""
    k1, k2, k3, k4 = jax.random.split(key, 4)
    bound1 = 1.0 / jnp.sqrt(in_feature)
    bound2 = 1.0 / jnp.sqrt(hidden)
    # stored transposed relative to PyTorch: [in, hidden] and [hidden, out]
    w1 = jax.random.uniform(k1, (in_feature, hidden), dtype, -bound1, bound1)
    b1 = jax.random.uniform(k2, (1, hidden), dtype, -bound1, bound1)
    w2 = jax.random.uniform(k3, (hidden, out_feature), dtype, -bound2, bound2)
    b2 = jax.random.uniform(k4, (1, out_feature), dtype, -bound2, bound2)
    return w1, b1, w2, b2


if __name__ == "__main__":
    key = jax.random.PRNGKey(0)
    kx, kp = jax.random.split(key)

    in_feature, out_feature = 64, 16
    w1, b1, w2, b2 = init_sgc_params(kp, in_feature, out_feature)

    def ref(xx):
        return (xx @ w1 + b1) @ w2 + b2

    # Aligned batch (2 grid steps -> both v7x TCs); f32 operand path first.
    batch = 64
    x = jax.random.normal(kx, (batch, in_feature), dtype=jnp.float32)
    y_ref = ref(x)

    y_f32 = jax.block_until_ready(
        sgc_forward(x, w1, b1, w2, b2, compute_dtype=jnp.float32))
    assert y_f32.shape == (batch, out_feature)
    assert jnp.allclose(y_f32, y_ref, atol=1e-4, rtol=1e-4), \
        f"f32 max err {float(jnp.max(jnp.abs(y_f32 - y_ref)))}"

    # Default path: bf16 MXU operands, f32 accumulation (looser tolerance).
    y_bf16 = jax.block_until_ready(sgc_forward(x, w1, b1, w2, b2))
    rel = jnp.max(jnp.abs(y_bf16 - y_ref)) / (jnp.max(jnp.abs(y_ref)) + 1e-6)
    assert rel < 5e-2, f"bf16 rel err too large: {rel}"

    # Ragged batch: exercises batch-padding + masked narrow-output writeback.
    x2 = jax.random.normal(kx, (70, in_feature), dtype=jnp.float32)
    y2 = jax.block_until_ready(sgc_forward(x2, w1, b1, w2, b2))
    y2_ref = ref(x2)
    rel2 = jnp.max(jnp.abs(y2 - y2_ref)) / (jnp.max(jnp.abs(y2_ref)) + 1e-6)
    assert y2.shape == (70, out_feature)
    assert rel2 < 5e-2, f"ragged bf16 rel err too large: {rel2}"

    # TODO(synk): nn.Dropout(p=0.1) is defined in the module but never applied
    # in forward(), so it is intentionally omitted.
    print("KERNEL_OK")
</pallas_src>

<mosaic_0001>
module attributes {stable_mosaic.version = 11 : i64} {
  func.func @_sgc_kernel(%arg0: i32, %arg1: i32, %arg2: memref<32x64xf32, #tpu.memory_space<vmem>>, %arg3: memref<64x512xf32, #tpu.memory_space<vmem>>, %arg4: memref<1x512xf32, #tpu.memory_space<vmem>>, %arg5: memref<512x16xf32, #tpu.memory_space<vmem>>, %arg6: memref<1x16xf32, #tpu.memory_space<vmem>>, %arg7: memref<32x16xf32, #tpu.memory_space<vmem>>, %arg8: memref<32x512xf32, #tpu.memory_space<vmem>>) attributes {dimension_semantics = [#tpu.dimension_semantics<parallel>, #tpu.dimension_semantics<arbitrary>], iteration_bounds = array<i64: 2, 1>, scalar_prefetch = 0 : i64, scratch_operands = 1 : i64, tpu.core_type = #tpu.core_type<tc>, window_params = [{transform_indices = @transform_0, window_bounds = array<i64: 32, 64>}, {pipeline_mode = #tpu.pipeline_mode<synchronous>, transform_indices = @transform_1, window_bounds = array<i64: 64, 512>}, {pipeline_mode = #tpu.pipeline_mode<synchronous>, transform_indices = @transform_2, window_bounds = array<i64: 1, 512>}, {pipeline_mode = #tpu.pipeline_mode<synchronous>, transform_indices = @transform_3, window_bounds = array<i64: 512, 16>}, {pipeline_mode = #tpu.pipeline_mode<synchronous>, transform_indices = @transform_4, window_bounds = array<i64: 1, 16>}, {transform_indices = @transform_5, window_bounds = array<i64: 32, 16>}]} {
    %c0_i32 = arith.constant 0 : i32
    %0 = arith.cmpi eq, %arg1, %c0_i32 : i32
    %1 = arith.extui %0 : i1 to i32
    %c0_i32_0 = arith.constant 0 : i32
    %2 = arith.cmpi ne, %1, %c0_i32_0 : i32
    scf.if %2 {
      %cst_10 = arith.constant 0.000000e+00 : f32
      %12 = vector.broadcast %cst_10 : f32 to vector<32x512xf32>
      %c0_11 = arith.constant 0 : index
      %c0_12 = arith.constant 0 : index
      %13 = vector.load %arg8[%c0_11, %c0_12] : memref<32x512xf32, #tpu.memory_space<vmem>>, vector<32x512xf32>
      tpu.vector_store %arg8[%c0_11, %c0_12], %12 {strides = array<i32>} : memref<32x512xf32, #tpu.memory_space<vmem>>, vector<32x512xf32>,
    } else {
    }
    %c0 = arith.constant 0 : index
    %c0_1 = arith.constant 0 : index
    %3 = vector.load %arg8[%c0, %c0_1] : memref<32x512xf32, #tpu.memory_space<vmem>>, vector<32x512xf32>
    %c0_2 = arith.constant 0 : index
    %c0_3 = arith.constant 0 : index
    %4 = vector.load %arg2[%c0_2, %c0_3] : memref<32x64xf32, #tpu.memory_space<vmem>>, vector<32x64xf32>
    %c0_4 = arith.constant 0 : index
    %c0_5 = arith.constant 0 : index
    %5 = vector.load %arg3[%c0_4, %c0_5] : memref<64x512xf32, #tpu.memory_space<vmem>>, vector<64x512xf32>
    %cst = arith.constant dense<0.000000e+00> : vector<32x512xf32>
    %6 = tpu.matmul %4, %5, %cst {dimension_numbers = #tpu.dot_dimension_numbers<[1], [0], [0], [1], [0, 0, 1, 1], [], []>} : vector<32x64xf32>, vector<64x512xf32>, vector<32x512xf32> -> vector<32x512xf32>
    %7 = arith.addf %3, %6 : vector<32x512xf32>
    %c0_6 = arith.constant 0 : index
    %c0_7 = arith.constant 0 : index
    %8 = vector.load %arg8[%c0_6, %c0_7] : memref<32x512xf32, #tpu.memory_space<vmem>>, vector<32x512xf32>
    tpu.vector_store %arg8[%c0_6, %c0_7], %7 {strides = array<i32>} : memref<32x512xf32, #tpu.memory_space<vmem>>, vector<32x512xf32>,
    %c0_i32_8 = arith.constant 0 : i32
    %9 = arith.cmpi eq, %arg1, %c0_i32_8 : i32
    %10 = arith.extui %9 : i1 to i32
    %c0_i32_9 = arith.constant 0 : i32
    %11 = arith.cmpi ne, %10, %c0_i32_9 : i32
    scf.if %11 {
      %c0_10 = arith.constant 0 : index
      %c0_11 = arith.constant 0 : index
      %12 = vector.load %arg8[%c0_10, %c0_11] : memref<32x512xf32, #tpu.memory_space<vmem>>, vector<32x512xf32>
      %c0_12 = arith.constant 0 : index
      %c0_13 = arith.constant 0 : index
      %13 = vector.load %arg4[%c0_12, %c0_13] : memref<1x512xf32, #tpu.memory_space<vmem>>, vector<1x512xf32>
      %14 = vector.broadcast %13 : vector<1x512xf32> to vector<32x512xf32>
      %15 = arith.addf %12, %14 : vector<32x512xf32>
      %c0_14 = arith.constant 0 : index
      %c0_15 = arith.constant 0 : index
      %16 = vector.load %arg5[%c0_14, %c0_15] : memref<512x16xf32, #tpu.memory_space<vmem>>, vector<512x16xf32>
      %cst_16 = arith.constant dense<0.000000e+00> : vector<32x16xf32>
      %17 = tpu.matmul %15, %16, %cst_16 {dimension_numbers = #tpu.dot_dimension_numbers<[1], [0], [0], [1], [0, 0, 1, 1], [], []>} : vector<32x512xf32>, vector<512x16xf32>, vector<32x16xf32> -> vector<32x16xf32>
      %c0_17 = arith.constant 0 : index
      %c0_18 = arith.constant 0 : index
      %18 = vector.load %arg6[%c0_17, %c0_18] : memref<1x16xf32, #tpu.memory_space<vmem>>, vector<1x16xf32>
      %19 = vector.broadcast %18 : vector<1x16xf32> to vector<32x16xf32>
      %20 = arith.addf %17, %19 : vector<32x16xf32>
      %c0_19 = arith.constant 0 : index
      %c0_20 = arith.constant 0 : index
      %21 = vector.load %arg7[%c0_19, %c0_20] : memref<32x16xf32, #tpu.memory_space<vmem>>, vector<32x16xf32>
      tpu.vector_store %arg7[%c0_19, %c0_20], %20 {strides = array<i32>} : memref<32x16xf32, #tpu.memory_space<vmem>>, vector<32x16xf32>,
    } else {
    }
    return
  }
  func.func @transform_0(%arg0: i32, %arg1: i32) -> (i32, i32) {
    %c0_i32 = arith.constant 0 : i32
    return %arg0, %arg1 : i32, i32
  }
  func.func @transform_1(%arg0: i32, %arg1: i32) -> (i32, i32) {
    %c0_i32 = arith.constant 0 : i32
    %c0_i32_0 = arith.constant 0 : i32
    return %arg1, %c0_i32 : i32, i32
  }
  func.func @transform_2(%arg0: i32, %arg1: i32) -> (i32, i32) {
    %c0_i32 = arith.constant 0 : i32
    %c0_i32_0 = arith.constant 0 : i32
    %c0_i32_1 = arith.constant 0 : i32
    return %c0_i32, %c0_i32_0 : i32, i32
  }
  func.func @transform_3(%arg0: i32, %arg1: i32) -> (i32, i32) {
    %c0_i32 = arith.constant 0 : i32
    %c0_i32_0 = arith.constant 0 : i32
    %c0_i32_1 = arith.constant 0 : i32
    return %c0_i32, %c0_i32_0 : i32, i32
  }
  func.func @transform_4(%arg0: i32, %arg1: i32) -> (i32, i32) {
    %c0_i32 = arith.constant 0 : i32
    %c0_i32_0 = arith.constant 0 : i32
    %c0_i32_1 = arith.constant 0 : i32
    return %c0_i32, %c0_i32_0 : i32, i32
  }
  func.func @transform_5(%arg0: i32, %arg1: i32) -> (i32, i32) {
    %c0_i32 = arith.constant 0 : i32
    %c0_i32_0 = arith.constant 0 : i32
    return %arg0, %c0_i32 : i32, i32
  }
}

</mosaic_0001>

<llo_original>
// kernel: sgc_forward.1
$region0: #{sgc_forward.1}
  #allocation0 [shape = 'u32[]', space=smem, size = 0x4, offset = 0x4, fixed_abs, tag = 'smem constant byte address 0x4 - core index']
  #allocation1 [shape = 'u32[144,128]{1,0:T(1,128)}', space=vmem, size = 0x12000, scoped, tag = 'internal scratch']
  #allocation2 [shape = 'f32[32,512]{1,0:T(8,128)}', space=vmem, size = 0x10000, scoped, tag = 'scratch operand']
  %s0 = inlined_call_operand.vmem [shape: f32[64,64], index: 0, kind: input, shape index: {}]
  %s1 = inlined_call_operand.vmem [shape: f32[64,512], index: 1, kind: input, shape index: {}]
  %s2 = inlined_call_operand.vmem [shape: f32[1,512], index: 2, kind: input, shape index: {}]
  %s3 = inlined_call_operand.vmem [shape: f32[512,16], index: 3, kind: input, shape index: {}]
  %s4 = inlined_call_operand.vmem [shape: f32[1,16], index: 4, kind: input, shape index: {}]
  %s5 = inlined_call_operand.vmem [shape: f32[64,16], index: 5, kind: output, shape index: {}]
  %s6 = sld [smem:[#allocation0]]
  $region61: #{sgc_forward.1} parent=0
    _
  %s8 = ssub.s32 1, %s6
  %s9 = scalar_select 0, %s8, %s6
  loop: start=0, step=1, limit=4
  $region2: #{sgc_forward.1} parent=0 // loop_pre_header
    _
  $region3: #{sgc_forward.1} parent=0 // loop_header
    %s11 = sphi 0, %s15
    %p12 = scmp.ge.s32.totalorder %s11, 4
    %s18 = sphi 0, %s30
    %s19 = sphi 0, %s26
    %s20 = sphi 0, %s18
    %s21 = sphi 0, %s19
    %s22 = sphi 0, %s20
    %s23 = sphi 0, %s21
    %s35 = sphi 0, %s37
    %s38 = sphi 0, %s35
    %s39 = sphi 0, %s38
    %s55 = sphi 0, %s39
    %s61 = sphi 0, %s63
    %s64 = sphi 0, %s61
    %s65 = sphi 0, %s64
    %s81 = sphi 0, %s65
    %s85 = sphi 0, %s85
    %s87 = sphi 0, %s85
    %s88 = sphi 0, %s87
    %s102 = sphi 0, %s88
    %s106 = sphi 0, %s106
    %s108 = sphi 0, %s106
    %s109 = sphi 0, %s108
    %s123 = sphi 0, %s109
    %s127 = sphi 0, %s127
    %s129 = sphi 0, %s127
    %s130 = sphi 0, %s129
    %s144 = sphi 0, %s130
    %s150 = sphi 0, %s152
    %s153 = sphi 0, %s150
    %s154 = sphi 0, %s153
    %s170 = sphi 0, %s154
  $region4: #{sgc_forward.1} parent=0 // loop_header_branch
    %14 = sbr.rel (%p12) target = $region8
  $region5: #{sgc_forward.1} parent=0 // loop_body
    %s16 = ssub.s32 %s11, 1
    %s17 = ssub.s32 %s11, 2
    %s24 = sadd.s32 1, %s19
    %p25 = scmp.ge.s32.totalorder %s24, 1
    %s26 = scalar_select %p25, 0, %s24
    %s27 = sadd.s32 1, %s18
    %s28 = scalar_select %p25, %s27, %s18
    %p29 = scmp.ge.s32.totalorder %s28, 2
    %s30 = scalar_select %p29, 0, %s28
    %s31 = ssub.s32 %s18, %s30
    %s32 = ssub.s32 %s19, %s26
    %s33 = sor.u32 %s31, %s32
    %p34 = scmp.eq.s32.totalorder %s33, 0
    %s36 = sadd.s32 %s35, 1
    %s37 = scalar_select %p34, %s35, %s36
    %p40 = pneg %p34
    %p41 = scmp.eq.s32.totalorder %s11, 1
    %p42 = por %p40, %p41
    %p43 = scmp.ne.s32.totalorder %s35, %s38
    %p44 = scmp.eq.s32.totalorder %s11, 0
    %p45 = por %p43, %p44
    %p46 = scmp.ne.s32.totalorder %s35, %s38
    %p47 = scmp.eq.s32.totalorder %s16, 1
    %p48 = por %p46, %p47
    %p49 = scmp.ne.s32.totalorder %s38, %s39
    %p50 = scmp.eq.s32.totalorder %s16, 0
    %p51 = por %p49, %p50
    %p52 = scmp.ne.s32.totalorder %s38, %s39
    %p53 = scmp.eq.s32.totalorder %s17, 1
    %p54 = por %p52, %p53
    %p56 = scmp.ne.s32.totalorder %s39, %s55
    %p57 = scmp.eq.s32.totalorder %s17, 0
    %p58 = por %p56, %p57
    %s59 = ssub.s32 %s19, %s26
    %p60 = scmp.eq.s32.totalorder %s59, 0
    %s62 = sadd.s32 %s61, 1
    %s63 = scalar_select %p60, %s61, %s62
    %p66 = pneg %p60
    %p67 = scmp.eq.s32.totalorder %s11, 1
    %p68 = por %p66, %p67
    %p69 = scmp.ne.s32.totalorder %s61, %s64
    %p70 = scmp.eq.s32.totalorder %s11, 0
    %p71 = por %p69, %p70
    %p72 = scmp.ne.s32.totalorder %s61, %s64
    %p73 = scmp.eq.s32.totalorder %s16, 1
    %p74 = por %p72, %p73
    %p75 = scmp.ne.s32.totalorder %s64, %s65
    %p76 = scmp.eq.s32.totalorder %s16, 0
    %p77 = por %p75, %p76
    %p78 = scmp.ne.s32.totalorder %s64, %s65
    %p79 = scmp.eq.s32.totalorder %s17, 1
    %p80 = por %p78, %p79
    %p82 = scmp.ne.s32.totalorder %s65, %s81
    %p83 = scmp.eq.s32.totalorder %s17, 0
    %p84 = por %p82, %p83
    %s86 = sadd.s32 %s85, 1
    %p89 = scmp.eq.s32.totalorder %s11, 1
    %p90 = scmp.ne.s32.totalorder %s85, %s87
    %p91 = scmp.eq.s32.totalorder %s11, 0
    %p92 = por %p90, %p91
    %p93 = scmp.ne.s32.totalorder %s85, %s87
    %p94 = scmp.eq.s32.totalorder %s16, 1
    %p95 = por %p93, %p94
    %p96 = scmp.ne.s32.totalorder %s87, %s88
    %p97 = scmp.eq.s32.totalorder %s16, 0
    %p98 = por %p96, %p97
    %p99 = scmp.ne.s32.totalorder %s87, %s88
    %p100 = scmp.eq.s32.totalorder %s17, 1
    %p101 = por %p99, %p100
    %p103 = scmp.ne.s32.totalorder %s88, %s102
    %p104 = scmp.eq.s32.totalorder %s17, 0
    %p105 = por %p103, %p104
    %s107 = sadd.s32 %s106, 1
    %p110 = scmp.eq.s32.totalorder %s11, 1
    %p111 = scmp.ne.s32.totalorder %s106, %s108
    %p112 = scmp.eq.s32.totalorder %s11, 0
    %p113 = por %p111, %p112
    %p114 = scmp.ne.s32.totalorder %s106, %s108
    %p115 = scmp.eq.s32.totalorder %s16, 1
    %p116 = por %p114, %p115
    %p117 = scmp.ne.s32.totalorder %s108, %s109
    %p118 = scmp.eq.s32.totalorder %s16, 0
    %p119 = por %p117, %p118
    %p120 = scmp.ne.s32.totalorder %s108, %s109
    %p121 = scmp.eq.s32.totalorder %s17, 1
    %p122 = por %p120, %p121
    %p124 = scmp.ne.s32.totalorder %s109, %s123
    %p125 = scmp.eq.s32.totalorder %s17, 0
    %p126 = por %p124, %p125
    %s128 = sadd.s32 %s127, 1
    %p131 = scmp.eq.s32.totalorder %s11, 1
    %p132 = scmp.ne.s32.totalorder %s127, %s129
    %p133 = scmp.eq.s32.totalorder %s11, 0
    %p134 = por %p132, %p133
    %p135 = scmp.ne.s32.totalorder %s127, %s129
    %p136 = scmp.eq.s32.totalorder %s16, 1
    %p137 = por %p135, %p136
    %p138 = scmp.ne.s32.totalorder %s129, %s130
    %p139 = scmp.eq.s32.totalorder %s16, 0
    %p140 = por %p138, %p139
    %p141 = scmp.ne.s32.totalorder %s129, %s130
    %p142 = scmp.eq.s32.totalorder %s17, 1
    %p143 = por %p141, %p142
    %p145 = scmp.ne.s32.totalorder %s130, %s144
    %p146 = scmp.eq.s32.totalorder %s17, 0
    %p147 = por %p145, %p146
    %s148 = ssub.s32 %s18, %s30
    %p149 = scmp.eq.s32.totalorder %s148, 0
    %s151 = sadd.s32 %s150, 1
    %s152 = scalar_select %p149, %s150, %s151
    %p155 = pneg %p149
    %p156 = scmp.eq.s32.totalorder %s11, 1
    %p157 = por %p155, %p156
    %p158 = scmp.ne.s32.totalorder %s150, %s153
    %p159 = scmp.eq.s32.totalorder %s11, 0
    %p160 = por %p158, %p159
    %p161 = scmp.ne.s32.totalorder %s150, %s153
    %p162 = scmp.eq.s32.totalorder %s16, 1
    %p163 = por %p161, %p162
    %p164 = scmp.ne.s32.totalorder %s153, %s154
    %p165 = scmp.eq.s32.totalorder %s16, 0
    %p166 = por %p164, %p165
    %p167 = scmp.ne.s32.totalorder %s153, %s154
    %p168 = scmp.eq.s32.totalorder %s17, 1
    %p169 = por %p167, %p168
    %p171 = scmp.ne.s32.totalorder %s154, %s170
    %p172 = scmp.eq.s32.totalorder %s17, 0
    %p173 = por %p171, %p172
    %p174 = scmp.le.s32.totalorder 1, %s11
    %p175 = scmp.lt.s32.totalorder %s11, 3
    %p176 = pnand %p174, %p175
    %p177 = pneg %p176
    // Predicated region
    $region9: #{sgc_forward.1} parent=5 // pred_check
      _
    $region10: #{sgc_forward.1} parent=5 // pred_check_branch
      %179 = sbr.rel (%p176) target = $region12
    $region11: #{sgc_forward.1} parent=5 // pred_region
      %s180 = ssub.s32 %s11, 1
      // Predicated region
      $region13: #{sgc_forward.1} parent=11 // pred_check
        %p181 = pneg %p77
      $region14: #{sgc_forward.1} parent=11 // pred_check_branch
        %183 = sbr.rel (%p181) target = $region16
      $region15: #{sgc_forward.1} parent=11 // pred_region
        %s184 = smul.u32 8, %s21
        %p185 = scmp.lt.s32.totalorder %s184, 7
        %s186 = scalar_select %p185, %s184, 7
        %s187 = smul.addr %s186, 4
        %s188 = smul.addr %s187, 8
        %s189 = scalar_lea.vmem %s1, %s188
        %s190 = smul.u32 8, %s21
      $region16: #{sgc_forward.1} parent=11 // pred_fallthru
        _
      // Predicated region
      $region17: #{sgc_forward.1} parent=11 // pred_check
        %p191 = pneg %p98
      $region18: #{sgc_forward.1} parent=11 // pred_check_branch
        %193 = sbr.rel (%p191) target = $region20
      $region19: #{sgc_forward.1} parent=11 // pred_region
        _
      $region20: #{sgc_forward.1} parent=11 // pred_fallthru
        _
      // Predicated region
      $region21: #{sgc_forward.1} parent=11 // pred_check
        %p194 = pneg %p119
      $region22: #{sgc_forward.1} parent=11 // pred_check_branch
        %196 = sbr.rel (%p194) target = $region24
      $region23: #{sgc_forward.1} parent=11 // pred_region
        _
      $region24: #{sgc_forward.1} parent=11 // pred_fallthru
        _
      // Predicated region
      $region25: #{sgc_forward.1} parent=11 // pred_check
        %p197 = pneg %p140
      $region26: #{sgc_forward.1} parent=11 // pred_check_branch
        %199 = sbr.rel (%p197) target = $region28
      $region27: #{sgc_forward.1} parent=11 // pred_region
        _
      $region28: #{sgc_forward.1} parent=11 // pred_fallthru
        _
    $region12: #{sgc_forward.1} parent=5 // pred_fallthru
      _
    %p200 = scmp.lt.s32.totalorder %s11, 2
    // Predicated region
    $region29: #{sgc_forward.1} parent=5 // pred_check
      %p201 = pneg %p200
    $region30: #{sgc_forward.1} parent=5 // pred_check_branch
      %203 = sbr.rel (%p201) target = $region32
    $region31: #{sgc_forward.1} parent=5 // pred_region
      // Predicated region
      $region33: #{sgc_forward.1} parent=31 // pred_check
        %p204 = pneg %p45
      $region34: #{sgc_forward.1} parent=31 // pred_check_branch
        %206 = sbr.rel (%p204) target = $region36
      $region35: #{sgc_forward.1} parent=31 // pred_region
        %s207 = smul.u32 4, %s18
        %p208 = scmp.lt.s32.totalorder %s207, 7
        %s209 = scalar_select %p208, %s207, 7
        %p210 = scmp.lt.s32.totalorder %s19, 0
        %s211 = scalar_select %p210, %s19, 0
        %s212 = sadd.s32 %s211, %s209
        %s213 = smul.addr %s212, 8
        %s214 = scalar_lea.vmem %s0, %s213
        %s215 = smul.u32 4, %s18
      $region36: #{sgc_forward.1} parent=31 // pred_fallthru
        _
    $region32: #{sgc_forward.1} parent=5 // pred_fallthru
      _
    %p216 = scmp.le.s32.totalorder 1, %s11
    %p217 = scmp.lt.s32.totalorder %s11, 3
    %p218 = pnand %p216, %p217
    %p219 = pneg %p218
    // Predicated region
    $region37: #{sgc_forward.1} parent=5 // pred_check
      _
    $region38: #{sgc_forward.1} parent=5 // pred_check_branch
      %221 = sbr.rel (%p218) target = $region40
    $region39: #{sgc_forward.1} parent=5 // pred_region
      %s222 = ssub.s32 %s11, 1
      %s223 = smul.u32 4, %s20
      %p224 = scmp.lt.s32.totalorder %s223, 7
      %s225 = scalar_select %p224, %s223, 7
      %p226 = scmp.lt.s32.totalorder %s21, 0
      %s227 = scalar_select %p226, %s21, 0
      %s228 = sadd.s32 %s227, %s225
      %s229 = smul.addr %s228, 8
      %s230 = scalar_lea.vmem %s0, %s229
      %p231 = pneg %p51
      %p232 = pneg %p48
      %s233 = smul.u32 8, %s21
      %p234 = scmp.lt.s32.totalorder %s233, 7
      %s235 = scalar_select %p234, %s233, 7
      %s236 = smul.addr %s235, 4
      %s237 = smul.addr %s236, 8
      %s238 = scalar_lea.vmem %s1, %s237
      %p239 = pneg %p77
      %p240 = pneg %p74
      %p241 = pneg %p98
      %p242 = pneg %p95
      %p243 = pneg %p119
      %p244 = pneg %p116
      %p245 = pneg %p140
      %p246 = pneg %p137
      %p247 = pneg %p166
      %p248 = pneg %p163
      %s249 = smul.u32 4, %s20
      %p250 = scmp.lt.s32.totalorder %s249, 7
      %s251 = scalar_select %p250, %s249, 7
      %s252 = smul.addr %s251, 8
      %s253 = scalar_lea.vmem %s5, %s252
      %s254 = smul.u32 4, %s20
      %p255 = scmp.lt.s32.totalorder %s254, 7
      %s256 = scalar_select %p255, %s254, 7
      %p257 = scmp.lt.s32.totalorder %s21, 0
      %s258 = scalar_select %p257, %s21, 0
      %s259 = sadd.s32 %s258, %s256
      %s260 = smul.addr %s259, 8
      %s261 = scalar_lea.vmem %s0, %s260
      %s262 = smul.u32 4, %s20
      %s263 = smul.u32 8, %s21
      %p264 = scmp.lt.s32.totalorder %s263, 7
      %s265 = scalar_select %p264, %s263, 7
      %s266 = smul.addr %s265, 4
      %s267 = smul.addr %s266, 8
      %s268 = scalar_lea.vmem %s1, %s267
      %s269 = smul.u32 8, %s21
      %s270 = smul.u32 4, %s20
      %p271 = scmp.lt.s32.totalorder %s270, 7
      %s272 = scalar_select %p271, %s270, 7
      %s273 = smul.addr %s272, 8
      %s274 = scalar_lea.vmem %s5, %s273
      %s275 = smul.u32 4, %s20
      %p276 = scmp.eq.s32.totalorder %s21, 0
      // Predicated region
      $region41: #{sgc_forward.1} parent=39 // pred_check
        %p277 = pneg %p276
      $region42: #{sgc_forward.1} parent=39 // pred_check_branch
        %279 = sbr.rel (%p277) target = $region44
      $region43: #{sgc_forward.1} parent=39 // pred_region
        %280 = vst [vmem:[#allocation2] sm:$0xff] 0.0
        %281 = vst [vmem:[#allocation2 + $0x8] sm:$0xff] 0.0
        %282 = vst [vmem:[#allocation2 + $0x10] sm:$0xff] 0.0
        %283 = vst [vmem:[#allocation2 + $0x18] sm:$0xff] 0.0
        %284 = vst [vmem:[#allocation2 + $0x20] sm:$0xff] 0.0
        %285 = vst [vmem:[#allocation2 + $0x28] sm:$0xff] 0.0
        %286 = vst [vmem:[#allocation2 + $0x30] sm:$0xff] 0.0
        %287 = vst [vmem:[#allocation2 + $0x38] sm:$0xff] 0.0
        %288 = vst [vmem:[#allocation2 + $0x40] sm:$0xff] 0.0
        %289 = vst [vmem:[#allocation2 + $0x48] sm:$0xff] 0.0
        %290 = vst [vmem:[#allocation2 + $0x50] sm:$0xff] 0.0
        %291 = vst [vmem:[#allocation2 + $0x58] sm:$0xff] 0.0
        %292 = vst [vmem:[#allocation2 + $0x60] sm:$0xff] 0.0
        %293 = vst [vmem:[#allocation2 + $0x68] sm:$0xff] 0.0
        %294 = vst [vmem:[#allocation2 + $0x70] sm:$0xff] 0.0
        %295 = vst [vmem:[#allocation2 + $0x78] sm:$0xff] 0.0
      $region44: #{sgc_forward.1} parent=39 // pred_fallthru
        _
      %v296 = vld [vmem:[#allocation2] sm:$0xff]
      %v297 = vld [vmem:[#allocation2 + $0x8] sm:$0xff]
      %v298 = vld [vmem:[#allocation2 + $0x10] sm:$0xff]
      %v299 = vld [vmem:[#allocation2 + $0x18] sm:$0xff]
      %v300 = vld [vmem:[#allocation2 + $0x20] sm:$0xff]
      %v301 = vld [vmem:[#allocation2 + $0x28] sm:$0xff]
      %v302 = vld [vmem:[#allocation2 + $0x30] sm:$0xff]
      %v303 = vld [vmem:[#allocation2 + $0x38] sm:$0xff]
      %v304 = vld [vmem:[#allocation2 + $0x40] sm:$0xff]
      %v305 = vld [vmem:[#allocation2 + $0x48] sm:$0xff]
      %v306 = vld [vmem:[#allocation2 + $0x50] sm:$0xff]
      %v307 = vld [vmem:[#allocation2 + $0x58] sm:$0xff]
      %v308 = vld [vmem:[#allocation2 + $0x60] sm:$0xff]
      %v309 = vld [vmem:[#allocation2 + $0x68] sm:$0xff]
      %v310 = vld [vmem:[#allocation2 + $0x70] sm:$0xff]
      %v311 = vld [vmem:[#allocation2 + $0x78] sm:$0xff]
      %v312 = vld [vmem:[%s261] sm:$0xff]
      %v313 = vld [vmem:[%s261 + $0x8] sm:$0xff]
      %v314 = vld [vmem:[%s261 + $0x10] sm:$0xff]
      %v315 = vld [vmem:[%s261 + $0x18] sm:$0xff]
      %v316 = vld [vmem:[%s268] sm:$0xff]
      %v317 = vld [vmem:[%s268 + $0x8] sm:$0xff]
      %v318 = vld [vmem:[%s268 + $0x10] sm:$0xff]
      %v319 = vld [vmem:[%s268 + $0x18] sm:$0xff]
      %v320 = vld [vmem:[%s268 + $0x20] sm:$0xff]
      %v321 = vld [vmem:[%s268 + $0x28] sm:$0xff]
      %v322 = vld [vmem:[%s268 + $0x30] sm:$0xff]
      %v323 = vld [vmem:[%s268 + $0x38] sm:$0xff]
      %v324 = vld [vmem:[%s268 + $0x40] sm:$0xff]
      %v325 = vld [vmem:[%s268 + $0x48] sm:$0xff]
      %v326 = vld [vmem:[%s268 + $0x50] sm:$0xff]
      %v327 = vld [vmem:[%s268 + $0x58] sm:$0xff]
      %v328 = vld [vmem:[%s268 + $0x60] sm:$0xff]
      %v329 = vld [vmem:[%s268 + $0x68] sm:$0xff]
      %v330 = vld [vmem:[%s268 + $0x70] sm:$0xff]
      %v331 = vld [vmem:[%s268 + $0x78] sm:$0xff]
      %v332 = vld [vmem:[%s268 + $0x80] sm:$0xff]
      %v333 = vld [vmem:[%s268 + $0x88] sm:$0xff]
      %v334 = vld [vmem:[%s268 + $0x90] sm:$0xff]
      %v335 = vld [vmem:[%s268 + $0x98] sm:$0xff]
      %v336 = vld [vmem:[%s268 + $0xa0] sm:$0xff]
      %v337 = vld [vmem:[%s268 + $0xa8] sm:$0xff]
      %v338 = vld [vmem:[%s268 + $0xb0] sm:$0xff]
      %v339 = vld [vmem:[%s268 + $0xb8] sm:$0xff]
      %v340 = vld [vmem:[%s268 + $0xc0] sm:$0xff]
      %v341 = vld [vmem:[%s268 + $0xc8] sm:$0xff]
      %v342 = vld [vmem:[%s268 + $0xd0] sm:$0xff]
      %v343 = vld [vmem:[%s268 + $0xd8] sm:$0xff]
      %v344 = vld [vmem:[%s268 + $0xe0] sm:$0xff]
      %v345 = vld [vmem:[%s268 + $0xe8] sm:$0xff]
      %v346 = vld [vmem:[%s268 + $0xf0] sm:$0xff]
      %v347 = vld [vmem:[%s268 + $0xf8] sm:$0xff]
      %vm348 = vcmask 523264
      %v350 = vsel %vm348, %v312, 0
      %v353 = vsel %vm348, %v313, 0
      %v356 = vsel %vm348, %v314, 0
      %v359 = vsel %vm348, %v315, 0
      %361 = vmatprep.subr.mxu0 %v317
      %362 = vmatpush1.msra.mxu0 %v316
      %363 = vmatprep.subr.mxu0 %v321
      %364 = vmatpush1.msra.mxu0 %v320
      %365 = vmatprep.subr.mxu0 %v325
      %366 = vmatpush1.msra.mxu0 %v324
      %367 = vmatprep.subr.mxu0 %v329
      %368 = vmatpush1.msra.mxu0 %v328
      %369 = vmatprep.subr.mxu0 %v333
      %370 = vmatpush1.msra.mxu0 %v332
      %371 = vmatprep.subr.mxu0 %v337
      %372 = vmatpush1.msra.mxu0 %v336
      %373 = vmatprep.subr.mxu0 %v341
      %374 = vmatpush1.msra.mxu0 %v340
      %375 = vmatprep.subr.mxu0 %v345
      %376 = vmatpush1.msra.mxu0 %v344
      %377 = vmatprep.subr.mxu0 0.0
      %378 = vmatpush1.msra.mxu0 0.0
      %379 = vmatprep.subr.mxu0 0.0
      %380 = vmatpush1.msra.mxu0 0.0
      %381 = vmatprep.subr.mxu0 0.0
      %382 = vmatpush1.msra.mxu0 0.0
      %383 = vmatprep.subr.mxu0 0.0
      %384 = vmatpush1.msra.mxu0 0.0
      %385 = vmatprep.subr.mxu0 0.0
      %386 = vmatpush1.msra.mxu0 0.0
      %387 = vmatprep.subr.mxu0 0.0
      %388 = vmatpush1.msra.mxu0 0.0
      %389 = vmatprep.subr.mxu0 0.0
      %390 = vmatpush1.msra.mxu0 0.0
      %391 = vmatprep.subr.mxu0 0.0
      %392 = vmatpush1.msra.mxu0 0.0
      %393 = vmatprep.subr.mxu0 0.0
      %394 = vmatpush1.msra.mxu0 0.0
      %395 = vmatprep.subr.mxu0 0.0
      %396 = vmatpush1.msra.mxu0 0.0
      %397 = vmatprep.subr.mxu0 0.0
      %398 = vmatpush1.msra.mxu0 0.0
      %399 = vmatprep.subr.mxu0 0.0
      %400 = vmatpush1.msra.mxu0 0.0
      %401 = vmatprep.subr.mxu0 0.0
      %402 = vmatpush1.msra.mxu0 0.0
      %403 = vmatprep.subr.mxu0 0.0
      %404 = vmatpush1.msra.mxu0 0.0
      %405 = vmatprep.subr.mxu0 0.0
      %406 = vmatpush1.msra.mxu0 0.0
      %407 = vmatprep.subr.mxu0 0.0
      %408 = vmatpush1.msra.mxu0 0.0
      %409 = vmatprep.subr.mxu0 0.0
      %410 = vmatpush1.msra.mxu0 0.0
      %411 = vmatprep.subr.mxu0 0.0
      %412 = vmatpush1.msra.mxu0 0.0
      %413 = vmatprep.subr.mxu0 0.0
      %414 = vmatpush1.msra.mxu0 0.0
      %415 = vmatprep.subr.mxu0 0.0
      %416 = vmatpush1.msra.mxu0 0.0
      %417 = vmatprep.subr.mxu0 0.0
      %418 = vmatpush1.msra.mxu0 0.0
      %419 = vmatprep.subr.mxu0 0.0
      %420 = vmatpush1.msra.mxu0 0.0
      %421 = vmatprep.subr.mxu0 0.0
      %422 = vmatpush1.msra.mxu0 0.0
      %423 = vmatprep.subr.mxu0 0.0
      %424 = vmatpush1.msra.mxu0 0.0
      %425 = vmatprep.mubr.f32.mxu0 0.0
      %426 = vmatmul.mubr.f32.gmra.mrb[0].mxu0 %v350
      %v427 = vpop.f32.mrb[0].mxu0
      %v428 = vadd.f32 0.0, %v427
      %v429 = vpop.f32.mrb[0].mxu0
      %v430 = vadd.f32 0.0, %v429
      %431 = vmatprep.mubr.f32.mxu0 0.0
      %432 = vmatmul.mubr.f32.gmra.mrb[0].mxu0 %v353
      %v433 = vpop.f32.mrb[0].mxu0
      %v434 = vadd.f32 0.0, %v433
      %v435 = vpop.f32.mrb[0].mxu0
      %v436 = vadd.f32 0.0, %v435
      %437 = vmatprep.mubr.f32.mxu0 0.0
      %438 = vmatmul.mubr.f32.gmra.mrb[0].mxu0 %v356
      %v439 = vpop.f32.mrb[0].mxu0
      %v440 = vadd.f32 0.0, %v439
      %v441 = vpop.f32.mrb[0].mxu0
      %v442 = vadd.f32 0.0, %v441
      %443 = vmatprep.mubr.f32.mxu0 0.0
      %444 = vmatmul.mubr.f32.gmra.mrb[0].mxu0 %v359
      %v445 = vpop.f32.mrb[0].mxu0
      %v446 = vadd.f32 0.0, %v445
      %v447 = vpop.f32.mrb[0].mxu0
      %v448 = vadd.f32 0.0, %v447
      %449 = vdwg.mxu0
      %450 = vmatprep.subr.mxu0 %v319
      %451 = vmatpush1.msra.mxu0 %v318
      %452 = vmatprep.subr.mxu0 %v323
      %453 = vmatpush1.msra.mxu0 %v322
      %454 = vmatprep.subr.mxu0 %v327
      %455 = vmatpush1.msra.mxu0 %v326
      %456 = vmatprep.subr.mxu0 %v331
      %457 = vmatpush1.msra.mxu0 %v330
      %458 = vmatprep.subr.mxu0 %v335
      %459 = vmatpush1.msra.mxu0 %v334
      %460 = vmatprep.subr.mxu0 %v339
      %461 = vmatpush1.msra.mxu0 %v338
      %462 = vmatprep.subr.mxu0 %v343
      %463 = vmatpush1.msra.mxu0 %v342
      %464 = vmatprep.subr.mxu0 %v347
      %465 = vmatpush1.msra.mxu0 %v346
      %466 = vmatprep.subr.mxu0 0.0
      %467 = vmatpush1.msra.mxu0 0.0
      %468 = vmatprep.subr.mxu0 0.0
      %469 = vmatpush1.msra.mxu0 0.0
      %470 = vmatprep.subr.mxu0 0.0
      %471 = vmatpush1.msra.mxu0 0.0
      %472 = vmatprep.subr.mxu0 0.0
      %473 = vmatpush1.msra.mxu0 0.0
      %474 = vmatprep.subr.mxu0 0.0
      %475 = vmatpush1.msra.mxu0 0.0
      %476 = vmatprep.subr.mxu0 0.0
      %477 = vmatpush1.msra.mxu0 0.0
      %478 = vmatprep.subr.mxu0 0.0
      %479 = vmatpush1.msra.mxu0 0.0
      %480 = vmatprep.subr.mxu0 0.0
      %481 = vmatpush1.msra.mxu0 0.0
      %482 = vmatprep.subr.mxu0 0.0
      %483 = vmatpush1.msra.mxu0 0.0
      %484 = vmatprep.subr.mxu0 0.0
      %485 = vmatpush1.msra.mxu0 0.0
      %486 = vmatprep.subr.mxu0 0.0
      %487 = vmatpush1.msra.mxu0 0.0
      %488 = vmatprep.subr.mxu0 0.0
      %489 = vmatpush1.msra.mxu0 0.0
      %490 = vmatprep.subr.mxu0 0.0
      %491 = vmatpush1.msra.mxu0 0.0
      %492 = vmatprep.subr.mxu0 0.0
      %493 = vmatpush1.msra.mxu0 0.0
      %494 = vmatprep.subr.mxu0 0.0
      %495 = vmatpush1.msra.mxu0 0.0
      %496 = vmatprep.subr.mxu0 0.0
      %497 = vmatpush1.msra.mxu0 0.0
      %498 = vmatprep.subr.mxu0 0.0
      %499 = vmatpush1.msra.mxu0 0.0
      %500 = vmatprep.subr.mxu0 0.0
      %501 = vmatpush1.msra.mxu0 0.0
      %502 = vmatprep.subr.mxu0 0.0
      %503 = vmatpush1.msra.mxu0 0.0
      %504 = vmatprep.subr.mxu0 0.0
      %505 = vmatpush1.msra.mxu0 0.0
      %506 = vmatprep.subr.mxu0 0.0
      %507 = vmatpush1.msra.mxu0 0.0
      %508 = vmatprep.subr.mxu0 0.0
      %509 = vmatpush1.msra.mxu0 0.0
      %510 = vmatprep.subr.mxu0 0.0
      %511 = vmatpush1.msra.mxu0 0.0
      %512 = vmatprep.subr.mxu0 0.0
      %513 = vmatpush1.msra.mxu0 0.0
      %514 = vmatprep.mubr.f32.mxu0 0.0
      %515 = vmatmul.mubr.f32.gmra.mrb[0].mxu0 %v350
      %v516 = vpop.f32.mrb[0].mxu0
      %v517 = vadd.f32 0.0, %v516
      %v518 = vpop.f32.mrb[0].mxu0
      %v519 = vadd.f32 0.0, %v518
      %520 = vmatprep.mubr.f32.mxu0 0.0
      %521 = vmatmul.mubr.f32.gmra.mrb[0].mxu0 %v353
      %v522 = vpop.f32.mrb[0].mxu0
      %v523 = vadd.f32 0.0, %v522
      %v524 = vpop.f32.mrb[0].mxu0
      %v525 = vadd.f32 0.0, %v524
      %526 = vmatprep.mubr.f32.mxu0 0.0
      %527 = vmatmul.mubr.f32.gmra.mrb[0].mxu0 %v356
      %v528 = vpop.f32.mrb[0].mxu0
      %v529 = vadd.f32 0.0, %v528
      %v530 = vpop.f32.mrb[0].mxu0
      %v531 = vadd.f32 0.0, %v530
      %532 = vmatprep.mubr.f32.mxu0 0.0
      %533 = vmatmul.mubr.f32.gmra.mrb[0].mxu0 %v359
      %v534 = vpop.f32.mrb[0].mxu0
      %v535 = vadd.f32 0.0, %v534
      %v536 = vpop.f32.mrb[0].mxu0
      %v537 = vadd.f32 0.0, %v536
      %538 = vdwg.mxu0
      %v539 = vadd.f32 %v296, %v428
      %v540 = vadd.f32 %v297, %v430
      %v541 = vadd.f32 %v298, %v517
      %v542 = vadd.f32 %v299, %v519
      %v543 = vadd.f32 %v300, %v434
      %v544 = vadd.f32 %v301, %v436
      %v545 = vadd.f32 %v302, %v523
      %v546 = vadd.f32 %v303, %v525
      %v547 = vadd.f32 %v304, %v440
      %v548 = vadd.f32 %v305, %v442
      %v549 = vadd.f32 %v306, %v529
      %v550 = vadd.f32 %v307, %v531
      %v551 = vadd.f32 %v308, %v446
      %v552 = vadd.f32 %v309, %v448
      %v553 = vadd.f32 %v310, %v535
      %v554 = vadd.f32 %v311, %v537
      %555 = vst [vmem:[#allocation2] sm:$0xff] %v539
      %556 = vst [vmem:[#allocation2 + $0x8] sm:$0xff] %v540
      %557 = vst [vmem:[#allocation2 + $0x10] sm:$0xff] %v541
      %558 = vst [vmem:[#allocation2 + $0x18] sm:$0xff] %v542
      %559 = vst [vmem:[#allocation2 + $0x20] sm:$0xff] %v543
      %560 = vst [vmem:[#allocation2 + $0x28] sm:$0xff] %v544
      %561 = vst [vmem:[#allocation2 + $0x30] sm:$0xff] %v545
      %562 = vst [vmem:[#allocation2 + $0x38] sm:$0xff] %v546
      %563 = vst [vmem:[#allocation2 + $0x40] sm:$0xff] %v547
      %564 = vst [vmem:[#allocation2 + $0x48] sm:$0xff] %v548
      %565 = vst [vmem:[#allocation2 + $0x50] sm:$0xff] %v549
      %566 = vst [vmem:[#allocation2 + $0x58] sm:$0xff] %v550
      %567 = vst [vmem:[#allocation2 + $0x60] sm:$0xff] %v551
      %568 = vst [vmem:[#allocation2 + $0x68] sm:$0xff] %v552
      %569 = vst [vmem:[#allocation2 + $0x70] sm:$0xff] %v553
      %570 = vst [vmem:[#allocation2 + $0x78] sm:$0xff] %v554
      // Predicated region
      $region45: #{sgc_forward.1} parent=39 // pred_check
        %p571 = pneg %p276
      $region46: #{sgc_forward.1} parent=39 // pred_check_branch
        %573 = sbr.rel (%p571) target = $region48
      $region47: #{sgc_forward.1} parent=39 // pred_region
        %v574 = vld [vmem:[#allocation2] sm:$0xff]
        %v575 = vld [vmem:[#allocation2 + $0x8] sm:$0xff]
        %v576 = vld [vmem:[#allocation2 + $0x10] sm:$0xff]
        %v577 = vld [vmem:[#allocation2 + $0x18] sm:$0xff]
        %v578 = vld [vmem:[#allocation2 + $0x20] sm:$0xff]
        %v579 = vld [vmem:[#allocation2 + $0x28] sm:$0xff]
        %v580 = vld [vmem:[#allocation2 + $0x30] sm:$0xff]
        %v581 = vld [vmem:[#allocation2 + $0x38] sm:$0xff]
        %v582 = vld [vmem:[#allocation2 + $0x40] sm:$0xff]
        %v583 = vld [vmem:[#allocation2 + $0x48] sm:$0xff]
        %v584 = vld [vmem:[#allocation2 + $0x50] sm:$0xff]
        %v585 = vld [vmem:[#allocation2 + $0x58] sm:$0xff]
        %v586 = vld [vmem:[#allocation2 + $0x60] sm:$0xff]
        %v587 = vld [vmem:[#allocation2 + $0x68] sm:$0xff]
        %v588 = vld [vmem:[#allocation2 + $0x70] sm:$0xff]
        %v589 = vld [vmem:[#allocation2 + $0x78] sm:$0xff]
        %v590 = vld [vmem:[%s2] sm:$0xf]
        %v592 = vlaneseq
        %v593 = vshrl.u32 %v592, 7
        %v594 = vsub.s32 0, %v593
        %v595 = vrot.slane %v590, %v594
        %v596 = vlaneseq
        %v597 = vshrl.u32 %v596, 7
        %v598 = vsub.s32 1, %v597
        %v599 = vrot.slane %v590, %v598
        %v600 = vlaneseq
        %v601 = vshrl.u32 %v600, 7
        %v602 = vsub.s32 2, %v601
        %v603 = vrot.slane %v590, %v602
        %v604 = vlaneseq
        %v605 = vshrl.u32 %v604, 7
        %v606 = vsub.s32 3, %v605
        %v607 = vrot.slane %v590, %v606
        %v612 = vadd.f32 %v574, %v595
        %v613 = vadd.f32 %v575, %v599
        %v614 = vadd.f32 %v576, %v603
        %v615 = vadd.f32 %v577, %v607
        %v616 = vadd.f32 %v578, %v595
        %v617 = vadd.f32 %v579, %v599
        %v618 = vadd.f32 %v580, %v603
        %v619 = vadd.f32 %v581, %v607
        %v620 = vadd.f32 %v582, %v595
        %v621 = vadd.f32 %v583, %v599
        %v622 = vadd.f32 %v584, %v603
        %v623 = vadd.f32 %v585, %v607
        %v624 = vadd.f32 %v586, %v595
        %v625 = vadd.f32 %v587, %v599
        %v626 = vadd.f32 %v588, %v603
        %v627 = vadd.f32 %v589, %v607
        %v628 = vld [vmem:[%s3] sm:$0xff]
        %v629 = vld [vmem:[%s3 + $0x8] sm:$0xff]
        %v630 = vld [vmem:[%s3 + $0x10] sm:$0xff]
        %v631 = vld [vmem:[%s3 + $0x18] sm:$0xff]
        %v632 = vld [vmem:[%s3 + $0x20] sm:$0xff]
        %v633 = vld [vmem:[%s3 + $0x28] sm:$0xff]
        %v634 = vld [vmem:[%s3 + $0x30] sm:$0xff]
        %v635 = vld [vmem:[%s3 + $0x38] sm:$0xff]
        %v636 = vld [vmem:[%s3 + $0x40] sm:$0xff]
        %v637 = vld [vmem:[%s3 + $0x48] sm:$0xff]
        %v638 = vld [vmem:[%s3 + $0x50] sm:$0xff]
        %v639 = vld [vmem:[%s3 + $0x58] sm:$0xff]
        %v640 = vld [vmem:[%s3 + $0x60] sm:$0xff]
        %v641 = vld [vmem:[%s3 + $0x68] sm:$0xff]
        %v642 = vld [vmem:[%s3 + $0x70] sm:$0xff]
        %v643 = vld [vmem:[%s3 + $0x78] sm:$0xff]
        %v644 = vld [vmem:[%s3 + $0x80] sm:$0xff]
        %v645 = vld [vmem:[%s3 + $0x88] sm:$0xff]
        %v646 = vld [vmem:[%s3 + $0x90] sm:$0xff]
        %v647 = vld [vmem:[%s3 + $0x98] sm:$0xff]
        %v648 = vld [vmem:[%s3 + $0xa0] sm:$0xff]
        %v649 = vld [vmem:[%s3 + $0xa8] sm:$0xff]
        %v650 = vld [vmem:[%s3 + $0xb0] sm:$0xff]
        %v651 = vld [vmem:[%s3 + $0xb8] sm:$0xff]
        %v652 = vld [vmem:[%s3 + $0xc0] sm:$0xff]
        %v653 = vld [vmem:[%s3 + $0xc8] sm:$0xff]
        %v654 = vld [vmem:[%s3 + $0xd0] sm:$0xff]
        %v655 = vld [vmem:[%s3 + $0xd8] sm:$0xff]
        %v656 = vld [vmem:[%s3 + $0xe0] sm:$0xff]
        %v657 = vld [vmem:[%s3 + $0xe8] sm:$0xff]
        %v658 = vld [vmem:[%s3 + $0xf0] sm:$0xff]
        %v659 = vld [vmem:[%s3 + $0xf8] sm:$0xff]
        %v660 = vld [vmem:[%s3 + $0x100] sm:$0xff]
        %v661 = vld [vmem:[%s3 + $0x108] sm:$0xff]
        %v662 = vld [vmem:[%s3 + $0x110] sm:$0xff]
        %v663 = vld [vmem:[%s3 + $0x118] sm:$0xff]
        %v664 = vld [vmem:[%s3 + $0x120] sm:$0xff]
        %v665 = vld [vmem:[%s3 + $0x128] sm:$0xff]
        %v666 = vld [vmem:[%s3 + $0x130] sm:$0xff]
        %v667 = vld [vmem:[%s3 + $0x138] sm:$0xff]
        %v668 = vld [vmem:[%s3 + $0x140] sm:$0xff]
        %v669 = vld [vmem:[%s3 + $0x148] sm:$0xff]
        %v670 = vld [vmem:[%s3 + $0x150] sm:$0xff]
        %v671 = vld [vmem:[%s3 + $0x158] sm:$0xff]
        %v672 = vld [vmem:[%s3 + $0x160] sm:$0xff]
        %v673 = vld [vmem:[%s3 + $0x168] sm:$0xff]
        %v674 = vld [vmem:[%s3 + $0x170] sm:$0xff]
        %v675 = vld [vmem:[%s3 + $0x178] sm:$0xff]
        %v676 = vld [vmem:[%s3 + $0x180] sm:$0xff]
        %v677 = vld [vmem:[%s3 + $0x188] sm:$0xff]
        %v678 = vld [vmem:[%s3 + $0x190] sm:$0xff]
        %v679 = vld [vmem:[%s3 + $0x198] sm:$0xff]
        %v680 = vld [vmem:[%s3 + $0x1a0] sm:$0xff]
        %v681 = vld [vmem:[%s3 + $0x1a8] sm:$0xff]
        %v682 = vld [vmem:[%s3 + $0x1b0] sm:$0xff]
        %v683 = vld [vmem:[%s3 + $0x1b8] sm:$0xff]
        %v684 = vld [vmem:[%s3 + $0x1c0] sm:$0xff]
        %v685 = vld [vmem:[%s3 + $0x1c8] sm:$0xff]
        %v686 = vld [vmem:[%s3 + $0x1d0] sm:$0xff]
        %v687 = vld [vmem:[%s3 + $0x1d8] sm:$0xff]
        %v688 = vld [vmem:[%s3 + $0x1e0] sm:$0xff]
        %v689 = vld [vmem:[%s3 + $0x1e8] sm:$0xff]
        %v690 = vld [vmem:[%s3 + $0x1f0] sm:$0xff]
        %v691 = vld [vmem:[%s3 + $0x1f8] sm:$0xff]
        %v692 = vld [vmem:[%s4] sm:$0x1]
        %v694 = vlaneseq
        %v695 = vshrl.u32 %v694, 7
        %v696 = vsub.s32 0, %v695
        %v697 = vrot.slane %v692, %v696
        %699 = vmatprep.subr.mxu0 0.0
        %700 = vmatpush1.msra.mxu0 %v628
        %701 = vmatprep.subr.mxu0 0.0
        %702 = vmatpush1.msra.mxu0 %v629
        %703 = vmatprep.subr.mxu0 0.0
        %704 = vmatpush1.msra.mxu0 %v630
        %705 = vmatprep.subr.mxu0 0.0
        %706 = vmatpush1.msra.mxu0 %v631
        %707 = vmatprep.subr.mxu0 0.0
        %708 = vmatpush1.msra.mxu0 %v632
        %709 = vmatprep.subr.mxu0 0.0
        %710 = vmatpush1.msra.mxu0 %v633
        %711 = vmatprep.subr.mxu0 0.0
        %712 = vmatpush1.msra.mxu0 %v634
        %713 = vmatprep.subr.mxu0 0.0
        %714 = vmatpush1.msra.mxu0 %v635
        %715 = vmatprep.subr.mxu0 0.0
        %716 = vmatpush1.msra.mxu0 %v636
        %717 = vmatprep.subr.mxu0 0.0
        %718 = vmatpush1.msra.mxu0 %v637
        %719 = vmatprep.subr.mxu0 0.0
        %720 = vmatpush1.msra.mxu0 %v638
        %721 = vmatprep.subr.mxu0 0.0
        %722 = vmatpush1.msra.mxu0 %v639
        %723 = vmatprep.subr.mxu0 0.0
        %724 = vmatpush1.msra.mxu0 %v640
        %725 = vmatprep.subr.mxu0 0.0
        %726 = vmatpush1.msra.mxu0 %v641
        %727 = vmatprep.subr.mxu0 0.0
        %728 = vmatpush1.msra.mxu0 %v642
        %729 = vmatprep.subr.mxu0 0.0
        %730 = vmatpush1.msra.mxu0 %v643
        %731 = vmatprep.subr.mxu0 0.0
        %732 = vmatpush1.msra.mxu0 %v644
        %733 = vmatprep.subr.mxu0 0.0
        %734 = vmatpush1.msra.mxu0 %v645
        %735 = vmatprep.subr.mxu0 0.0
        %736 = vmatpush1.msra.mxu0 %v646
        %737 = vmatprep.subr.mxu0 0.0
        %738 = vmatpush1.msra.mxu0 %v647
        %739 = vmatprep.subr.mxu0 0.0
        %740 = vmatpush1.msra.mxu0 %v648
        %741 = vmatprep.subr.mxu0 0.0
        %742 = vmatpush1.msra.mxu0 %v649
        %743 = vmatprep.subr.mxu0 0.0
        %744 = vmatpush1.msra.mxu0 %v650
        %745 = vmatprep.subr.mxu0 0.0
        %746 = vmatpush1.msra.mxu0 %v651
        %747 = vmatprep.subr.mxu0 0.0
        %748 = vmatpush1.msra.mxu0 %v652
        %749 = vmatprep.subr.mxu0 0.0
        %750 = vmatpush1.msra.mxu0 %v653
        %751 = vmatprep.subr.mxu0 0.0
        %752 = vmatpush1.msra.mxu0 %v654
        %753 = vmatprep.subr.mxu0 0.0
        %754 = vmatpush1.msra.mxu0 %v655
        %755 = vmatprep.subr.mxu0 0.0
        %756 = vmatpush1.msra.mxu0 %v656
        %757 = vmatprep.subr.mxu0 0.0
        %758 = vmatpush1.msra.mxu0 %v657
        %759 = vmatprep.subr.mxu0 0.0
        %760 = vmatpush1.msra.mxu0 %v658
        %761 = vmatprep.subr.mxu0 0.0
        %762 = vmatpush1.msra.mxu0 %v659
        %763 = vmatprep.mubr.f32.mxu0 %v613
        %764 = vmatmul.mubr.f32.gmra.mrb[0].mxu0 %v612
        %v765 = vpop.f32.mrb[0].mxu0
        %v766 = vadd.f32 %v697, %v765
        %v767 = vpop.f32.mrb[0].mxu0
        %768 = vmatprep.mubr.f32.mxu0 %v617
        %769 = vmatmul.mubr.f32.gmra.mrb[0].mxu0 %v616
        %v770 = vpop.f32.mrb[0].mxu0
        %v771 = vadd.f32 %v697, %v770
        %v772 = vpop.f32.mrb[0].mxu0
        %773 = vmatprep.mubr.f32.mxu0 %v621
        %774 = vmatmul.mubr.f32.gmra.mrb[0].mxu0 %v620
        %v775 = vpop.f32.mrb[0].mxu0
        %v776 = vadd.f32 %v697, %v775
        %v777 = vpop.f32.mrb[0].mxu0
        %778 = vmatprep.mubr.f32.mxu0 %v625
        %779 = vmatmul.mubr.f32.gmra.mrb[0].mxu0 %v624
        %v780 = vpop.f32.mrb[0].mxu0
        %v781 = vadd.f32 %v697, %v780
        %v782 = vpop.f32.mrb[0].mxu0
        %783 = vdwg.mxu0
        %784 = vmatprep.subr.mxu0 0.0
        %785 = vmatpush1.msra.mxu0 %v660
        %786 = vmatprep.subr.mxu0 0.0
        %787 = vmatpush1.msra.mxu0 %v661
        %788 = vmatprep.subr.mxu0 0.0
        %789 = vmatpush1.msra.mxu0 %v662
        %790 = vmatprep.subr.mxu0 0.0
        %791 = vmatpush1.msra.mxu0 %v663
        %792 = vmatprep.subr.mxu0 0.0
        %793 = vmatpush1.msra.mxu0 %v664
        %794 = vmatprep.subr.mxu0 0.0
        %795 = vmatpush1.msra.mxu0 %v665
        %796 = vmatprep.subr.mxu0 0.0
        %797 = vmatpush1.msra.mxu0 %v666
        %798 = vmatprep.subr.mxu0 0.0
        %799 = vmatpush1.msra.mxu0 %v667
        %800 = vmatprep.subr.mxu0 0.0
        %801 = vmatpush1.msra.mxu0 %v668
        %802 = vmatprep.subr.mxu0 0.0
        %803 = vmatpush1.msra.mxu0 %v669
        %804 = vmatprep.subr.mxu0 0.0
        %805 = vmatpush1.msra.mxu0 %v670
        %806 = vmatprep.subr.mxu0 0.0
        %807 = vmatpush1.msra.mxu0 %v671
        %808 = vmatprep.subr.mxu0 0.0
        %809 = vmatpush1.msra.mxu0 %v672
        %810 = vmatprep.subr.mxu0 0.0
        %811 = vmatpush1.msra.mxu0 %v673
        %812 = vmatprep.subr.mxu0 0.0
        %813 = vmatpush1.msra.mxu0 %v674
        %814 = vmatprep.subr.mxu0 0.0
        %815 = vmatpush1.msra.mxu0 %v675
        %816 = vmatprep.subr.mxu0 0.0
        %817 = vmatpush1.msra.mxu0 %v676
        %818 = vmatprep.subr.mxu0 0.0
        %819 = vmatpush1.msra.mxu0 %v677
        %820 = vmatprep.subr.mxu0 0.0
        %821 = vmatpush1.msra.mxu0 %v678
        %822 = vmatprep.subr.mxu0 0.0
        %823 = vmatpush1.msra.mxu0 %v679
        %824 = vmatprep.subr.mxu0 0.0
        %825 = vmatpush1.msra.mxu0 %v680
        %826 = vmatprep.subr.mxu0 0.0
        %827 = vmatpush1.msra.mxu0 %v681
        %828 = vmatprep.subr.mxu0 0.0
        %829 = vmatpush1.msra.mxu0 %v682
        %830 = vmatprep.subr.mxu0 0.0
        %831 = vmatpush1.msra.mxu0 %v683
        %832 = vmatprep.subr.mxu0 0.0
        %833 = vmatpush1.msra.mxu0 %v684
        %834 = vmatprep.subr.mxu0 0.0
        %835 = vmatpush1.msra.mxu0 %v685
        %836 = vmatprep.subr.mxu0 0.0
        %837 = vmatpush1.msra.mxu0 %v686
        %838 = vmatprep.subr.mxu0 0.0
        %839 = vmatpush1.msra.mxu0 %v687
        %840 = vmatprep.subr.mxu0 0.0
        %841 = vmatpush1.msra.mxu0 %v688
        %842 = vmatprep.subr.mxu0 0.0
        %843 = vmatpush1.msra.mxu0 %v689
        %844 = vmatprep.subr.mxu0 0.0
        %845 = vmatpush1.msra.mxu0 %v690
        %846 = vmatprep.subr.mxu0 0.0
        %847 = vmatpush1.msra.mxu0 %v691
        %848 = vmatprep.mubr.f32.mxu0 %v615
        %849 = vmatmul.mubr.f32.gmra.mrb[0].mxu0 %v614
        %v850 = vpop.f32.mrb[0].mxu0
        %v851 = vadd.f32 %v766, %v850
        %v852 = vpop.f32.mrb[0].mxu0
        %853 = vmatprep.mubr.f32.mxu0 %v619
        %854 = vmatmul.mubr.f32.gmra.mrb[0].mxu0 %v618
        %v855 = vpop.f32.mrb[0].mxu0
        %v856 = vadd.f32 %v771, %v855
        %v857 = vpop.f32.mrb[0].mxu0
        %858 = vmatprep.mubr.f32.mxu0 %v623
        %859 = vmatmul.mubr.f32.gmra.mrb[0].mxu0 %v622
        %v860 = vpop.f32.mrb[0].mxu0
        %v861 = vadd.f32 %v776, %v860
        %v862 = vpop.f32.mrb[0].mxu0
        %863 = vmatprep.mubr.f32.mxu0 %v627
        %864 = vmatmul.mubr.f32.gmra.mrb[0].mxu0 %v626
        %v865 = vpop.f32.mrb[0].mxu0
        %v866 = vadd.f32 %v781, %v865
        %v867 = vpop.f32.mrb[0].mxu0
        %868 = vdwg.mxu0
        %vm869 = vcmask 130048
        %870 = vst.msk [vmem:[%s274] sm:$0xff] %vm869, %v851
        %871 = vst.msk [vmem:[%s274 + $0x8] sm:$0xff] %vm869, %v856
        %872 = vst.msk [vmem:[%s274 + $0x10] sm:$0xff] %vm869, %v861
        %873 = vst.msk [vmem:[%s274 + $0x18] sm:$0xff] %vm869, %v866
      $region48: #{sgc_forward.1} parent=39 // pred_fallthru
        _
      %s874 = smul.u32 4, %s20
      %p875 = scmp.lt.s32.totalorder %s874, 7
      %s876 = scalar_select %p875, %s874, 7
      %s877 = smul.addr %s876, 8
      %s878 = scalar_lea.vmem %s5, %s877
      // Predicated region
      $region49: #{sgc_forward.1} parent=39 // pred_check
        %p879 = pneg %p163
      $region50: #{sgc_forward.1} parent=39 // pred_check_branch
        %881 = sbr.rel (%p879) target = $region52
      $region51: #{sgc_forward.1} parent=39 // pred_region
        %s882 = smul.u32 4, %s20
      $region52: #{sgc_forward.1} parent=39 // pred_fallthru
        _
    $region40: #{sgc_forward.1} parent=5 // pred_fallthru
      _
    %p883 = scmp.le.s32.totalorder 2, %s11
    // Predicated region
    $region53: #{sgc_forward.1} parent=5 // pred_check
      %p884 = pneg %p883
    $region54: #{sgc_forward.1} parent=5 // pred_check_branch
      %886 = sbr.rel (%p884) target = $region56
    $region55: #{sgc_forward.1} parent=5 // pred_region
      %s887 = ssub.s32 %s11, 2
      // Predicated region
      $region57: #{sgc_forward.1} parent=55 // pred_check
        %p888 = pneg %p169
      $region58: #{sgc_forward.1} parent=55 // pred_check_branch
        %890 = sbr.rel (%p888) target = $region60
      $region59: #{sgc_forward.1} parent=55 // pred_region
        %s891 = smul.u32 4, %s22
        %p892 = scmp.lt.s32.totalorder %s891, 7
        %s893 = scalar_select %p892, %s891, 7
        %s894 = smul.addr %s893, 8
        %s895 = scalar_lea.vmem %s5, %s894
      $region60: #{sgc_forward.1} parent=55 // pred_fallthru
        _
    $region56: #{sgc_forward.1} parent=5 // pred_fallthru
      _
  $region6: #{sgc_forward.1} parent=0 // loop_footer
    %s15 = sadd.s32 1, %s11
  $region7: #{sgc_forward.1} parent=0 // loop_footer_branch
    %10 = sbr.rel target = $region3
  $region8: #{sgc_forward.1} parent=0 // loop_exit
    _

</llo_original>
